<compile_context>
chip_gen: v5e
topology: v5e:2x2
jax: 0.10.0
libtpu: 0.0.40
codegen_flags: <defaults>
</compile_context>

<pallas_src>
import functools
import math

import jax
import jax.numpy as jnp
import numpy as np
from jax.experimental import pallas as pl
from jax.experimental.pallas import tpu as pltpu


# --------------------------------------------------------------------------- #
# Kernel
# --------------------------------------------------------------------------- #
def _basic_block_kernel(x_ref, res_ref, w1_ref, s1_ref, b1_ref,
                        w2_ref, s2_ref, b2_ref, out_ref, hpad_ref, *, Bt, H):
    WCo = out_ref.shape[-1]                  # W * Cout (128 at the test shape)

    x = x_ref[...]                           # (Bt, H+2, Kpad) bf16

    def hrows(t, kh):
        # rows [kh, kh+H) of every image, flattened over batch for a 2-D matmul.
        # TODO(synk): with Bt>1 this reshape is a relayout copy (per-image halo
        # rows break contiguity); a rank-3 dot_general would avoid it if Mosaic
        # accepted a rank-3 LHS without batch dims.
        blk = t[:, kh:kh + H, :]
        return blk.reshape(Bt * H, blk.shape[-1])

    # ---- conv1: 3 MXU matmuls (kw taps + output width folded into band matrices)
    acc1 = jnp.dot(hrows(x, 0), w1_ref[0], preferred_element_type=jnp.float32)
    acc1 = acc1 + jnp.dot(hrows(x, 1), w1_ref[1], preferred_element_type=jnp.float32)
    acc1 = acc1 + jnp.dot(hrows(x, 2), w1_ref[2], preferred_element_type=jnp.float32)

    # bn1 + relu -> (Bt*H, W*Cout): lane-dense, no W-halo columns anymore.
    h = jnp.maximum(acc1 * s1_ref[...] + b1_ref[...], 0.0)

    # H-halo: zero only the two border rows of the persistent scratch each step
    # (the interior is fully rewritten, and per-step zeroing is the safe form
    # under v7x megacore "parallel" sharding of the batch grid axis).
    hpad_ref[:, 0:1, :] = jnp.zeros((Bt, 1, WCo), jnp.float32)
    hpad_ref[:, H + 1:H + 2, :] = jnp.zeros((Bt, 1, WCo), jnp.float32)
    hpad_ref[:, 1:H + 1, :] = h.reshape(Bt, H, WCo)
    hp = hpad_ref[...].astype(jnp.bfloat16)  # conv2 consumes bf16

    # ---- conv2 (SAME W-padding already folded into w2's band matrix) ----
    acc2 = jnp.dot(hrows(hp, 0), w2_ref[0], preferred_element_type=jnp.float32)
    acc2 = acc2 + jnp.dot(hrows(hp, 1), w2_ref[1], preferred_element_type=jnp.float32)
    acc2 = acc2 + jnp.dot(hrows(hp, 2), w2_ref[2], preferred_element_type=jnp.float32)

    # ---- bn2 + exact f32 residual (streamed lane-dense from HBM) + relu ----
    res = res_ref[...].reshape(Bt * H, WCo)  # contiguous, no halo rows -> cheap
    o = jnp.maximum(acc2 * s2_ref[...] + b2_ref[...] + res, 0.0)
    out_ref[...] = o.reshape(Bt, H, WCo)     # lane-dense (128-wide) store


# --------------------------------------------------------------------------- #
# Host-side weight re-packing (static index math, numpy, done once)
# --------------------------------------------------------------------------- #
def _band_conv_matrix(w_hwio, *, out_w, in_w, in_shift):
    """Block-banded matrix so one kh tap of a 3x3 conv is a single matmul.

    big[kh, (j+kw+in_shift)*Ci + ci, j*Co + co] = w[kh, kw, ci, co]
    Out-of-range input columns are dropped, which folds zero W-padding
    directly into the matrix.
    """
    KH, KW, Ci, Co = w_hwio.shape
    big = np.zeros((KH, in_w * Ci, out_w * Co), np.float32)
    for kh in range(KH):
        for kw in range(KW):
            for j in range(out_w):
                jin = j + kw + in_shift
                if 0 <= jin < in_w:
                    big[kh, jin * Ci:(jin + 1) * Ci, j * Co:(j + 1) * Co] = w_hwio[kh, kw]
    return big


def _pick_batch_tile(N, H, target_m=256):
    """Largest divisor of N such that Bt*H does not exceed the MXU edge target
    (256 on v6e/v7x; >=128 also fills v5e).  No forced grid>=2: on 1-TC parts
    the grid is a serial loop, so splitting a tiny batch only adds per-step
    overhead; for large N the resulting multi-step grid still shards across the
    two v7x TensorCores via dimension_semantics=("parallel",)."""
    cap = max(1, target_m // max(H, 1))
    best = 1
    for d in range(1, N + 1):
        if N % d == 0 and d <= cap:
            best = d
    return best


# --------------------------------------------------------------------------- #
# Public wrapper (NCHW in / NCHW out, like the PyTorch module)
# --------------------------------------------------------------------------- #
def basic_block_pallas(x_nchw, params, *, batch_tile=None):
    N, Cin, H, W = x_nchw.shape
    Cout = params["w1"].shape[0]
    assert Cout >= Cin  # PyramidNet-style zero-channel-padded residual

    Bt = batch_tile if batch_tile is not None else _pick_batch_tile(N, H)
    assert N % Bt == 0

    Kin = (W + 2) * Cin
    Kpad = ((Kin + 127) // 128) * 128        # lane-dense input rows (unmasked vld)
    WCo = W * Cout                           # 128 at the test shape

    # NCHW -> NHWC (channels contiguous / channels-last).
    x_nhwc = jnp.transpose(x_nchw, (0, 2, 3, 1))

    # Conv input: spatial pad=1, row-flatten, zero-pad lanes to Kpad, cast bf16
    # (the kernel only ever needs bf16 operands now that the residual is exact
    # and streamed separately).
    xpad = jnp.pad(x_nhwc, ((0, 0), (1, 1), (1, 1), (0, 0))).reshape(N, H + 2, Kin)
    xpad = jnp.pad(xpad, ((0, 0), (0, 0), (0, Kpad - Kin))).astype(jnp.bfloat16)

    # Exact f32 residual, zero-channel-padded, already in the output's
    # lane-dense (N, H, W*Cout) layout.
    res = jnp.pad(x_nhwc, ((0, 0), (0, 0), (0, 0), (0, Cout - Cin))).reshape(N, H, WCo)

    # Band matrices (OIHW -> HWIO first).  conv1: padded-width input -> W-wide
    # output; conv2: SAME padding folded in (W-wide input and output).
    w1_hwio = np.asarray(jnp.transpose(params["w1"], (2, 3, 1, 0)))
    w2_hwio = np.asarray(jnp.transpose(params["w2"], (2, 3, 1, 0)))
    w1_big = np.zeros((3, Kpad, WCo), np.float32)
    w1_big[:, :Kin, :] = _band_conv_matrix(w1_hwio, out_w=W, in_w=W + 2, in_shift=0)
    w2_big = _band_conv_matrix(w2_hwio, out_w=W, in_w=W, in_shift=-1)
    w1_big = jnp.asarray(w1_big, jnp.bfloat16)
    w2_big = jnp.asarray(w2_big, jnp.bfloat16)

    # Folded BN scale/bias tiled along W (plain 128-wide tiles, no halo blocks).
    s1 = jnp.tile(params["s1"], W).reshape(1, WCo)
    b1 = jnp.tile(params["b1"], W).reshape(1, WCo)
    s2 = jnp.tile(params["s2"], W).reshape(1, WCo)
    b2 = jnp.tile(params["b2"], W).reshape(1, WCo)

    kernel = functools.partial(_basic_block_kernel, Bt=Bt, H=H)

    # NOTE: band matrices scale as W^2*Cin*Cout and the weight specs have a
    # constant index_map (no re-fetch across steps); for production-size layers
    # re-derive the VMEM budget per generation (v7x: 64 MiB) and set
    # vmem_limit_bytes / fall back to per-tap channels-last matmuls.
    out = pl.pallas_call(
        kernel,
        out_shape=jax.ShapeDtypeStruct((N, H, WCo), jnp.float32),
        grid_spec=pltpu.PrefetchScalarGridSpec(
            num_scalar_prefetch=0,
            grid=(N // Bt,),
            in_specs=[
                pl.BlockSpec((Bt, H + 2, Kpad), lambda n: (n, 0, 0)),  # bf16 conv input
                pl.BlockSpec((Bt, H, WCo), lambda n: (n, 0, 0)),       # f32 exact residual
                pl.BlockSpec((3, Kpad, WCo), lambda n: (0, 0, 0)),     # conv1 band matrix
                pl.BlockSpec((1, WCo), lambda n: (0, 0)),              # bn1 scale
                pl.BlockSpec((1, WCo), lambda n: (0, 0)),              # bn1 bias
                pl.BlockSpec((3, WCo, WCo), lambda n: (0, 0, 0)),      # conv2 band matrix
                pl.BlockSpec((1, WCo), lambda n: (0, 0)),              # bn2 scale
                pl.BlockSpec((1, WCo), lambda n: (0, 0)),              # bn2 bias
            ],
            out_specs=pl.BlockSpec((Bt, H, WCo), lambda n: (n, 0, 0)),
            scratch_shapes=[pltpu.VMEM((Bt, H + 2, WCo), jnp.float32)],
        ),
        compiler_params=pltpu.CompilerParams(dimension_semantics=("parallel",)),
    )(xpad, res, w1_big, s1, b1, w2_big, s2, b2)

    # (N, H, W*Cout) -> (N, H, W, Cout) -> NCHW
    return jnp.transpose(out.reshape(N, H, W, Cout), (0, 3, 1, 2))


# --------------------------------------------------------------------------- #
# References
# --------------------------------------------------------------------------- #
def basic_block_reference(x_nchw, params, *, mxu_bf16=True):
    """Pure-JAX reference (NCHW).  With mxu_bf16=True the conv operands are cast
    to bf16 with f32 accumulation -- the same single-pass MXU numerics as the
    Pallas kernel; the residual add is exact f32 in both implementations."""
    dn = ("NCHW", "OIHW", "NCHW")
    Cin = x_nchw.shape[1]
    Cout = params["w1"].shape[0]

    def conv(x, w):
        if mxu_bf16:
            return jax.lax.conv_general_dilated(
                x.astype(jnp.bfloat16), w.astype(jnp.bfloat16), (1, 1),
                ((1, 1), (1, 1)), dimension_numbers=dn,
                preferred_element_type=jnp.float32)
        return jax.lax.conv_general_dilated(
            x, w, (1, 1), ((1, 1), (1, 1)), dimension_numbers=dn,
            precision=jax.lax.Precision.HIGHEST)

    out = conv(x_nchw, params["w1"])
    out = out * params["s1"][None, :, None, None] + params["b1"][None, :, None, None]
    out = jnp.maximum(out, 0.0)
    out = conv(out, params["w2"])
    out = out * params["s2"][None, :, None, None] + params["b2"][None, :, None, None]
    identity = jnp.pad(x_nchw, ((0, 0), (0, Cout - Cin), (0, 0), (0, 0)))
    out = out + identity
    return jnp.maximum(out, 0.0)


def make_params(key, inplanes, planes):
    """Deterministic synthetic parameters (BatchNorm folded to scale/bias)."""
    ks = jax.random.split(key, 10)
    w1 = jax.random.normal(ks[0], (planes, inplanes, 3, 3), jnp.float32) / math.sqrt(9 * inplanes)
    w2 = jax.random.normal(ks[1], (planes, planes, 3, 3), jnp.float32) / math.sqrt(9 * planes)
    eps = 1e-5
    gamma1 = 1.0 + 0.1 * jax.random.normal(ks[2], (planes,), jnp.float32)
    beta1 = 0.1 * jax.random.normal(ks[3], (planes,), jnp.float32)
    mean1 = 0.1 * jax.random.normal(ks[4], (planes,), jnp.float32)
    var1 = jnp.abs(jax.random.normal(ks[5], (planes,), jnp.float32)) + 0.5
    gamma2 = 1.0 + 0.1 * jax.random.normal(ks[6], (planes,), jnp.float32)
    beta2 = 0.1 * jax.random.normal(ks[7], (planes,), jnp.float32)
    mean2 = 0.1 * jax.random.normal(ks[8], (planes,), jnp.float32)
    var2 = jnp.abs(jax.random.normal(ks[9], (planes,), jnp.float32)) + 0.5
    s1 = gamma1 / jnp.sqrt(var1 + eps)
    b1 = beta1 - mean1 * s1
    s2 = gamma2 / jnp.sqrt(var2 + eps)
    b2 = beta2 - mean2 * s2
    # TODO(synk): training-mode BatchNorm (batch statistics) not modeled; inference-mode fold only.
    return {"w1": w1, "w2": w2, "s1": s1, "b1": b1, "s2": s2, "b2": b2}


if __name__ == "__main__":
    key = jax.random.PRNGKey(0)
    k_x, k_p = jax.random.split(key)

    N, inplanes, H, W = 2, 4, 16, 16
    planes = 8  # planes > inplanes exercises the zero-channel-pad residual path

    x = jax.random.normal(k_x, (N, inplanes, H, W), jnp.float32)
    params = make_params(k_p, inplanes, planes)

    out = jax.block_until_ready(basic_block_pallas(x, params))

    # Reference with matching MXU numerics (bf16 operands, f32 accumulation);
    # the residual path is exact f32 in both implementations.
    ref = jax.block_until_ready(basic_block_reference(x, params, mxu_bf16=True))
    np.testing.assert_allclose(np.asarray(out), np.asarray(ref), rtol=2e-3, atol=2e-3)

    print("KERNEL_OK")
</pallas_src>

<mosaic_0001>
module attributes {stable_mosaic.version = 11 : i64} {
  func.func @_basic_block_kernel(%arg0: i32, %arg1: memref<2x18x128xbf16, #tpu.memory_space<vmem>>, %arg2: memref<2x16x128xf32, #tpu.memory_space<vmem>>, %arg3: memref<3x128x128xbf16, #tpu.memory_space<vmem>>, %arg4: memref<1x128xf32, #tpu.memory_space<vmem>>, %arg5: memref<1x128xf32, #tpu.memory_space<vmem>>, %arg6: memref<3x128x128xbf16, #tpu.memory_space<vmem>>, %arg7: memref<1x128xf32, #tpu.memory_space<vmem>>, %arg8: memref<1x128xf32, #tpu.memory_space<vmem>>, %arg9: memref<2x16x128xf32, #tpu.memory_space<vmem>>, %arg10: memref<2x18x128xf32, #tpu.memory_space<vmem>>) attributes {dimension_semantics = [#tpu.dimension_semantics<parallel>], iteration_bounds = array<i64: 1>, scalar_prefetch = 0 : i64, scratch_operands = 1 : i64, tpu.core_type = #tpu.core_type<tc>, window_params = [{transform_indices = @transform_0, window_bounds = array<i64: 2, 18, 128>}, {transform_indices = @transform_1, window_bounds = array<i64: 2, 16, 128>}, {pipeline_mode = #tpu.pipeline_mode<synchronous>, transform_indices = @transform_2, window_bounds = array<i64: 3, 128, 128>}, {pipeline_mode = #tpu.pipeline_mode<synchronous>, transform_indices = @transform_3, window_bounds = array<i64: 1, 128>}, {pipeline_mode = #tpu.pipeline_mode<synchronous>, transform_indices = @transform_4, window_bounds = array<i64: 1, 128>}, {pipeline_mode = #tpu.pipeline_mode<synchronous>, transform_indices = @transform_5, window_bounds = array<i64: 3, 128, 128>}, {pipeline_mode = #tpu.pipeline_mode<synchronous>, transform_indices = @transform_6, window_bounds = array<i64: 1, 128>}, {pipeline_mode = #tpu.pipeline_mode<synchronous>, transform_indices = @transform_7, window_bounds = array<i64: 1, 128>}, {transform_indices = @transform_8, window_bounds = array<i64: 2, 16, 128>}]} {
    %c0 = arith.constant 0 : index
    %c0_0 = arith.constant 0 : index
    %c0_1 = arith.constant 0 : index
    %0 = vector.load %arg1[%c0, %c0_0, %c0_1] : memref<2x18x128xbf16, #tpu.memory_space<vmem>>, vector<2x18x128xbf16>
    %1 = vector.extract_strided_slice %0 {offsets = [0, 0, 0], sizes = [2, 16, 128], strides = [1, 1, 1]} : vector<2x18x128xbf16> to vector<2x16x128xbf16>
    %2 = vector.shape_cast %1 : vector<2x16x128xbf16> to vector<32x128xbf16>
    %c0_2 = arith.constant 0 : index
    %c0_3 = arith.constant 0 : index
    %c0_4 = arith.constant 0 : index
    %3 = vector.load %arg3[%c0_2, %c0_3, %c0_4] : memref<3x128x128xbf16, #tpu.memory_space<vmem>>, vector<1x128x128xbf16>
    %4 = vector.shape_cast %3 : vector<1x128x128xbf16> to vector<128x128xbf16>
    %cst = arith.constant dense<0.000000e+00> : vector<32x128xf32>
    %5 = tpu.matmul %2, %4, %cst {dimension_numbers = #tpu.dot_dimension_numbers<[1], [0], [0], [1], [0, 0, 1, 1], [], []>} : vector<32x128xbf16>, vector<128x128xbf16>, vector<32x128xf32> -> vector<32x128xf32>
    %6 = vector.extract_strided_slice %0 {offsets = [0, 1, 0], sizes = [2, 16, 128], strides = [1, 1, 1]} : vector<2x18x128xbf16> to vector<2x16x128xbf16>
    %7 = vector.shape_cast %6 : vector<2x16x128xbf16> to vector<32x128xbf16>
    %c1 = arith.constant 1 : index
    %c0_5 = arith.constant 0 : index
    %c0_6 = arith.constant 0 : index
    %8 = vector.load %arg3[%c1, %c0_5, %c0_6] : memref<3x128x128xbf16, #tpu.memory_space<vmem>>, vector<1x128x128xbf16>
    %9 = vector.shape_cast %8 : vector<1x128x128xbf16> to vector<128x128xbf16>
    %cst_7 = arith.constant dense<0.000000e+00> : vector<32x128xf32>
    %10 = tpu.matmul %7, %9, %cst_7 {dimension_numbers = #tpu.dot_dimension_numbers<[1], [0], [0], [1], [0, 0, 1, 1], [], []>} : vector<32x128xbf16>, vector<128x128xbf16>, vector<32x128xf32> -> vector<32x128xf32>
    %11 = arith.addf %5, %10 : vector<32x128xf32>
    %12 = vector.extract_strided_slice %0 {offsets = [0, 2, 0], sizes = [2, 16, 128], strides = [1, 1, 1]} : vector<2x18x128xbf16> to vector<2x16x128xbf16>
    %13 = vector.shape_cast %12 : vector<2x16x128xbf16> to vector<32x128xbf16>
    %c2 = arith.constant 2 : index
    %c0_8 = arith.constant 0 : index
    %c0_9 = arith.constant 0 : index
    %14 = vector.load %arg3[%c2, %c0_8, %c0_9] : memref<3x128x128xbf16, #tpu.memory_space<vmem>>, vector<1x128x128xbf16>
    %15 = vector.shape_cast %14 : vector<1x128x128xbf16> to vector<128x128xbf16>
    %cst_10 = arith.constant dense<0.000000e+00> : vector<32x128xf32>
    %16 = tpu.matmul %13, %15, %cst_10 {dimension_numbers = #tpu.dot_dimension_numbers<[1], [0], [0], [1], [0, 0, 1, 1], [], []>} : vector<32x128xbf16>, vector<128x128xbf16>, vector<32x128xf32> -> vector<32x128xf32>
    %17 = arith.addf %11, %16 : vector<32x128xf32>
    %c0_11 = arith.constant 0 : index
    %c0_12 = arith.constant 0 : index
    %18 = vector.load %arg4[%c0_11, %c0_12] : memref<1x128xf32, #tpu.memory_space<vmem>>, vector<1x128xf32>
    %19 = vector.broadcast %18 : vector<1x128xf32> to vector<32x128xf32>
    %20 = arith.mulf %17, %19 : vector<32x128xf32>
    %c0_13 = arith.constant 0 : index
    %c0_14 = arith.constant 0 : index
    %21 = vector.load %arg5[%c0_13, %c0_14] : memref<1x128xf32, #tpu.memory_space<vmem>>, vector<1x128xf32>
    %22 = vector.broadcast %21 : vector<1x128xf32> to vector<32x128xf32>
    %23 = arith.addf %20, %22 : vector<32x128xf32>
    %cst_15 = arith.constant 0.000000e+00 : f32
    %24 = vector.broadcast %cst_15 : f32 to vector<32x128xf32>
    %25 = arith.maximumf %23, %24 : vector<32x128xf32>
    %cst_16 = arith.constant 0.000000e+00 : f32
    %26 = vector.broadcast %cst_16 : f32 to vector<2x1x128xf32>
    %c0_17 = arith.constant 0 : index
    %c0_18 = arith.constant 0 : index
    %c0_19 = arith.constant 0 : index
    %27 = vector.load %arg10[%c0_17, %c0_18, %c0_19] : memref<2x18x128xf32, #tpu.memory_space<vmem>>, vector<2x1x128xf32>
    tpu.vector_store %arg10[%c0_17, %c0_18, %c0_19], %26 {strides = array<i32>} : memref<2x18x128xf32, #tpu.memory_space<vmem>>, vector<2x1x128xf32>,
    %cst_20 = arith.constant 0.000000e+00 : f32
    %28 = vector.broadcast %cst_20 : f32 to vector<2x1x128xf32>
    %c0_21 = arith.constant 0 : index
    %c17 = arith.constant 17 : index
    %c0_22 = arith.constant 0 : index
    %29 = vector.load %arg10[%c0_21, %c17, %c0_22] : memref<2x18x128xf32, #tpu.memory_space<vmem>>, vector<2x1x128xf32>
    tpu.vector_store %arg10[%c0_21, %c17, %c0_22], %28 {strides = array<i32>} : memref<2x18x128xf32, #tpu.memory_space<vmem>>, vector<2x1x128xf32>,
    %30 = vector.shape_cast %25 : vector<32x128xf32> to vector<2x16x128xf32>
    %c0_23 = arith.constant 0 : index
    %c1_24 = arith.constant 1 : index
    %c0_25 = arith.constant 0 : index
    %31 = vector.load %arg10[%c0_23, %c1_24, %c0_25] : memref<2x18x128xf32, #tpu.memory_space<vmem>>, vector<2x16x128xf32>
    tpu.vector_store %arg10[%c0_23, %c1_24, %c0_25], %30 {strides = array<i32>} : memref<2x18x128xf32, #tpu.memory_space<vmem>>, vector<2x16x128xf32>,
    %c0_26 = arith.constant 0 : index
    %c0_27 = arith.constant 0 : index
    %c0_28 = arith.constant 0 : index
    %32 = vector.load %arg10[%c0_26, %c0_27, %c0_28] : memref<2x18x128xf32, #tpu.memory_space<vmem>>, vector<2x18x128xf32>
    %33 = arith.truncf %32 : vector<2x18x128xf32> to vector<2x18x128xbf16>
    %34 = vector.extract_strided_slice %33 {offsets = [0, 0, 0], sizes = [2, 16, 128], strides = [1, 1, 1]} : vector<2x18x128xbf16> to vector<2x16x128xbf16>
    %35 = vector.shape_cast %34 : vector<2x16x128xbf16> to vector<32x128xbf16>
    %c0_29 = arith.constant 0 : index
    %c0_30 = arith.constant 0 : index
    %c0_31 = arith.constant 0 : index
    %36 = vector.load %arg6[%c0_29, %c0_30, %c0_31] : memref<3x128x128xbf16, #tpu.memory_space<vmem>>, vector<1x128x128xbf16>
    %37 = vector.shape_cast %36 : vector<1x128x128xbf16> to vector<128x128xbf16>
    %cst_32 = arith.constant dense<0.000000e+00> : vector<32x128xf32>
    %38 = tpu.matmul %35, %37, %cst_32 {dimension_numbers = #tpu.dot_dimension_numbers<[1], [0], [0], [1], [0, 0, 1, 1], [], []>} : vector<32x128xbf16>, vector<128x128xbf16>, vector<32x128xf32> -> vector<32x128xf32>
    %39 = vector.extract_strided_slice %33 {offsets = [0, 1, 0], sizes = [2, 16, 128], strides = [1, 1, 1]} : vector<2x18x128xbf16> to vector<2x16x128xbf16>
    %40 = vector.shape_cast %39 : vector<2x16x128xbf16> to vector<32x128xbf16>
    %c1_33 = arith.constant 1 : index
    %c0_34 = arith.constant 0 : index
    %c0_35 = arith.constant 0 : index
    %41 = vector.load %arg6[%c1_33, %c0_34, %c0_35] : memref<3x128x128xbf16, #tpu.memory_space<vmem>>, vector<1x128x128xbf16>
    %42 = vector.shape_cast %41 : vector<1x128x128xbf16> to vector<128x128xbf16>
    %cst_36 = arith.constant dense<0.000000e+00> : vector<32x128xf32>
    %43 = tpu.matmul %40, %42, %cst_36 {dimension_numbers = #tpu.dot_dimension_numbers<[1], [0], [0], [1], [0, 0, 1, 1], [], []>} : vector<32x128xbf16>, vector<128x128xbf16>, vector<32x128xf32> -> vector<32x128xf32>
    %44 = arith.addf %38, %43 : vector<32x128xf32>
    %45 = vector.extract_strided_slice %33 {offsets = [0, 2, 0], sizes = [2, 16, 128], strides = [1, 1, 1]} : vector<2x18x128xbf16> to vector<2x16x128xbf16>
    %46 = vector.shape_cast %45 : vector<2x16x128xbf16> to vector<32x128xbf16>
    %c2_37 = arith.constant 2 : index
    %c0_38 = arith.constant 0 : index
    %c0_39 = arith.constant 0 : index
    %47 = vector.load %arg6[%c2_37, %c0_38, %c0_39] : memref<3x128x128xbf16, #tpu.memory_space<vmem>>, vector<1x128x128xbf16>
    %48 = vector.shape_cast %47 : vector<1x128x128xbf16> to vector<128x128xbf16>
    %cst_40 = arith.constant dense<0.000000e+00> : vector<32x128xf32>
    %49 = tpu.matmul %46, %48, %cst_40 {dimension_numbers = #tpu.dot_dimension_numbers<[1], [0], [0], [1], [0, 0, 1, 1], [], []>} : vector<32x128xbf16>, vector<128x128xbf16>, vector<32x128xf32> -> vector<32x128xf32>
    %50 = arith.addf %44, %49 : vector<32x128xf32>
    %c0_41 = arith.constant 0 : index
    %c0_42 = arith.constant 0 : index
    %c0_43 = arith.constant 0 : index
    %51 = vector.load %arg2[%c0_41, %c0_42, %c0_43] : memref<2x16x128xf32, #tpu.memory_space<vmem>>, vector<2x16x128xf32>
    %52 = vector.shape_cast %51 : vector<2x16x128xf32> to vector<32x128xf32>
    %c0_44 = arith.constant 0 : index
    %c0_45 = arith.constant 0 : index
    %53 = vector.load %arg7[%c0_44, %c0_45] : memref<1x128xf32, #tpu.memory_space<vmem>>, vector<1x128xf32>
    %54 = vector.broadcast %53 : vector<1x128xf32> to vector<32x128xf32>
    %55 = arith.mulf %50, %54 : vector<32x128xf32>
    %c0_46 = arith.constant 0 : index
    %c0_47 = arith.constant 0 : index
    %56 = vector.load %arg8[%c0_46, %c0_47] : memref<1x128xf32, #tpu.memory_space<vmem>>, vector<1x128xf32>
    %57 = vector.broadcast %56 : vector<1x128xf32> to vector<32x128xf32>
    %58 = arith.addf %55, %57 : vector<32x128xf32>
    %59 = arith.addf %58, %52 : vector<32x128xf32>
    %cst_48 = arith.constant 0.000000e+00 : f32
    %60 = vector.broadcast %cst_48 : f32 to vector<32x128xf32>
    %61 = arith.maximumf %59, %60 : vector<32x128xf32>
    %62 = vector.shape_cast %61 : vector<32x128xf32> to vector<2x16x128xf32>
    %c0_49 = arith.constant 0 : index
    %c0_50 = arith.constant 0 : index
    %c0_51 = arith.constant 0 : index
    %63 = vector.load %arg9[%c0_49, %c0_50, %c0_51] : memref<2x16x128xf32, #tpu.memory_space<vmem>>, vector<2x16x128xf32>
    tpu.vector_store %arg9[%c0_49, %c0_50, %c0_51], %62 {strides = array<i32>} : memref<2x16x128xf32, #tpu.memory_space<vmem>>, vector<2x16x128xf32>,
    return
  }
  func.func @transform_0(%arg0: i32) -> (i32, i32, i32) {
    %c0_i32 = arith.constant 0 : i32
    %c0_i32_0 = arith.constant 0 : i32
    %c0_i32_1 = arith.constant 0 : i32
    return %arg0, %c0_i32, %c0_i32_0 : i32, i32, i32
  }
  func.func @transform_1(%arg0: i32) -> (i32, i32, i32) {
    %c0_i32 = arith.constant 0 : i32
    %c0_i32_0 = arith.constant 0 : i32
    %c0_i32_1 = arith.constant 0 : i32
    return %arg0, %c0_i32, %c0_i32_0 : i32, i32, i32
  }
  func.func @transform_2(%arg0: i32) -> (i32, i32, i32) {
    %c0_i32 = arith.constant 0 : i32
    %c0_i32_0 = arith.constant 0 : i32
    %c0_i32_1 = arith.constant 0 : i32
    %c0_i32_2 = arith.constant 0 : i32
    return %c0_i32, %c0_i32_0, %c0_i32_1 : i32, i32, i32
  }
  func.func @transform_3(%arg0: i32) -> (i32, i32) {
    %c0_i32 = arith.constant 0 : i32
    %c0_i32_0 = arith.constant 0 : i32
    %c0_i32_1 = arith.constant 0 : i32
    return %c0_i32, %c0_i32_0 : i32, i32
  }
  func.func @transform_4(%arg0: i32) -> (i32, i32) {
    %c0_i32 = arith.constant 0 : i32
    %c0_i32_0 = arith.constant 0 : i32
    %c0_i32_1 = arith.constant 0 : i32
    return %c0_i32, %c0_i32_0 : i32, i32
  }
  func.func @transform_5(%arg0: i32) -> (i32, i32, i32) {
    %c0_i32 = arith.constant 0 : i32
    %c0_i32_0 = arith.constant 0 : i32
    %c0_i32_1 = arith.constant 0 : i32
    %c0_i32_2 = arith.constant 0 : i32
    return %c0_i32, %c0_i32_0, %c0_i32_1 : i32, i32, i32
  }
  func.func @transform_6(%arg0: i32) -> (i32, i32) {
    %c0_i32 = arith.constant 0 : i32
    %c0_i32_0 = arith.constant 0 : i32
    %c0_i32_1 = arith.constant 0 : i32
    return %c0_i32, %c0_i32_0 : i32, i32
  }
  func.func @transform_7(%arg0: i32) -> (i32, i32) {
    %c0_i32 = arith.constant 0 : i32
    %c0_i32_0 = arith.constant 0 : i32
    %c0_i32_1 = arith.constant 0 : i32
    return %c0_i32, %c0_i32_0 : i32, i32
  }
  func.func @transform_8(%arg0: i32) -> (i32, i32, i32) {
    %c0_i32 = arith.constant 0 : i32
    %c0_i32_0 = arith.constant 0 : i32
    %c0_i32_1 = arith.constant 0 : i32
    return %arg0, %c0_i32, %c0_i32_0 : i32, i32, i32
  }
}

</mosaic_0001>

<llo_original>
// kernel: tpu_custom_call.1
$region0: #{tpu_custom_call.1}
  #allocation0 [shape = 'u32[]', space=smem, size = 0x4, offset = 0x4, fixed_abs, tag = 'smem constant byte address 0x4 - core index']
  #allocation1 [shape = 'u32[72,128]{1,0:T(1,128)}', space=vmem, size = 0x9000, scoped, tag = 'internal scratch']
  #allocation2 [shape = 'f32[2,18,128]{2,1,0:T(8,128)}', space=vmem, size = 0x6000, scoped, tag = 'scratch operand']
  %s0 = inlined_call_operand.vmem [shape: bf16[2,18,128], index: 0, kind: input, shape index: {}]
  %s1 = inlined_call_operand.vmem [shape: f32[2,16,128], index: 1, kind: input, shape index: {}]
  %s2 = inlined_call_operand.hbm [shape: bf16[3,128,128], index: 2, kind: input, shape index: {}]
  %s3 = inlined_call_operand.vmem [shape: f32[1,128], index: 3, kind: input, shape index: {}]
  %s4 = inlined_call_operand.vmem [shape: f32[1,128], index: 4, kind: input, shape index: {}]
  %s5 = inlined_call_operand.hbm [shape: bf16[3,128,128], index: 5, kind: input, shape index: {}]
  %s6 = inlined_call_operand.vmem [shape: f32[1,128], index: 6, kind: input, shape index: {}]
  %s7 = inlined_call_operand.vmem [shape: f32[1,128], index: 7, kind: input, shape index: {}]
  %s8 = inlined_call_operand.hbm [shape: f32[2,16,128], index: 8, kind: output, shape index: {}]
  %s9 = sld [smem:[#allocation0]]
  $region50: #{tpu_custom_call.1} parent=0
    _
  %s11 = ssub.s32 1, %s9
  %s12 = scalar_select 0, %s11, %s9
  $region1: #{tpu_custom_call.1} parent=0
    #allocation3 [shape = 'u8[98304]{0}', space=vmem, size = 0x18000, scoped, tag = 'input window, operand 2, single buffered']
    #allocation4 [shape = 's32[1]{0}', space=sflag, size = 0x4, scoped, tag = 'scoped memory for tpu_custom_call.1']
    #allocation5 [shape = 's32[1]{0}', space=sflag, size = 0x4, scoped, tag = 'scoped memory for tpu_custom_call.1']
    #allocation6 [shape = 'u8[98304]{0}', space=vmem, size = 0x18000, scoped, tag = 'input window, operand 5, single buffered']
    #allocation7 [shape = 's32[1]{0}', space=sflag, size = 0x4, scoped, tag = 'scoped memory for tpu_custom_call.1']
    #allocation8 [shape = 'u8[16384]{0}', space=vmem, size = 0x4000, scoped, tag = 'output window, operand 0, single buffered']
    %13 = vsyncpa [#allocation4], 0
    %14 = vsyncpa [#allocation7], 0
    %15 = vsyncpa [#allocation5], 0
    // Predicated region
    $region2: #{tpu_custom_call.1} parent=1 // pred_check
      _
    $region3: #{tpu_custom_call.1} parent=1 // pred_check_branch
      %17 = sbr.rel (0) target = $region5
    $region4: #{tpu_custom_call.1} parent=1 // pred_region
      _
    $region5: #{tpu_custom_call.1} parent=1 // pred_fallthru
      _
    // Predicated region
    $region6: #{tpu_custom_call.1} parent=1 // pred_check
      _
    $region7: #{tpu_custom_call.1} parent=1 // pred_check_branch
      %19 = sbr.rel (0) target = $region9
    $region8: #{tpu_custom_call.1} parent=1 // pred_region
      _
    $region9: #{tpu_custom_call.1} parent=1 // pred_fallthru
      _
    // Predicated region
    $region10: #{tpu_custom_call.1} parent=1 // pred_check
      _
    $region11: #{tpu_custom_call.1} parent=1 // pred_check_branch
      %21 = sbr.rel (0) target = $region13
    $region12: #{tpu_custom_call.1} parent=1 // pred_region
      %23 = vsyncadd [#allocation4], 0
      %s24 = sshll.u32 %s2, 4
      %s25 = int_to_ptr.hbm [resolvable:$true] %s24
      %s26 = sshll.u32 [#allocation3], 4
      %s27 = int_to_ptr.vmem [resolvable:$true] %s26
      %32 = dma.hbm_to_vmem [thread:$0]  %s25, 3072, %s27, [#allocation4], 64, 64, 4
    $region13: #{tpu_custom_call.1} parent=1 // pred_fallthru
      _
    // Predicated region
    $region14: #{tpu_custom_call.1} parent=1 // pred_check
      _
    $region15: #{tpu_custom_call.1} parent=1 // pred_check_branch
      %34 = sbr.rel (0) target = $region17
    $region16: #{tpu_custom_call.1} parent=1 // pred_region
      _
    $region17: #{tpu_custom_call.1} parent=1 // pred_fallthru
      _
    // Predicated region
    $region18: #{tpu_custom_call.1} parent=1 // pred_check
      _
    $region19: #{tpu_custom_call.1} parent=1 // pred_check_branch
      %36 = sbr.rel (0) target = $region21
    $region20: #{tpu_custom_call.1} parent=1 // pred_region
      _
    $region21: #{tpu_custom_call.1} parent=1 // pred_fallthru
      _
    // Predicated region
    $region22: #{tpu_custom_call.1} parent=1 // pred_check
      _
    $region23: #{tpu_custom_call.1} parent=1 // pred_check_branch
      %38 = sbr.rel (0) target = $region25
    $region24: #{tpu_custom_call.1} parent=1 // pred_region
      %40 = vsyncadd [#allocation7], 0
      %s41 = sshll.u32 %s5, 4
      %s42 = int_to_ptr.hbm [resolvable:$true] %s41
      %s43 = sshll.u32 [#allocation6], 4
      %s44 = int_to_ptr.vmem [resolvable:$true] %s43
      %49 = dma.hbm_to_vmem [thread:$0]  %s42, 3072, %s44, [#allocation7], 64, 64, 4
    $region25: #{tpu_custom_call.1} parent=1 // pred_fallthru
      _
    // Predicated region
    $region26: #{tpu_custom_call.1} parent=1 // pred_check
      _
    $region27: #{tpu_custom_call.1} parent=1 // pred_check_branch
      %51 = sbr.rel (0) target = $region29
    $region28: #{tpu_custom_call.1} parent=1 // pred_region
      _
    $region29: #{tpu_custom_call.1} parent=1 // pred_fallthru
      _
    // Predicated region
    $region30: #{tpu_custom_call.1} parent=1 // pred_check
      _
    $region31: #{tpu_custom_call.1} parent=1 // pred_check_branch
      %53 = sbr.rel (0) target = $region33
    $region32: #{tpu_custom_call.1} parent=1 // pred_region
      _
    $region33: #{tpu_custom_call.1} parent=1 // pred_fallthru
      _
    // Predicated region
    $region34: #{tpu_custom_call.1} parent=1 // pred_check
      _
    $region35: #{tpu_custom_call.1} parent=1 // pred_check_branch
      %55 = sbr.rel (0) target = $region37
    $region36: #{tpu_custom_call.1} parent=1 // pred_region
      %57 = dma.done [#allocation4], 3072
    $region37: #{tpu_custom_call.1} parent=1 // pred_fallthru
      _
    // Predicated region
    $region38: #{tpu_custom_call.1} parent=1 // pred_check
      _
    $region39: #{tpu_custom_call.1} parent=1 // pred_check_branch
      %59 = sbr.rel (0) target = $region41
    $region40: #{tpu_custom_call.1} parent=1 // pred_region
      %61 = dma.done [#allocation7], 3072
    $region41: #{tpu_custom_call.1} parent=1 // pred_fallthru
      _
    %v62 = vld [vmem:[%s0] sm:$0xf]
    %v63 = vld [vmem:[%s0 + $0x4] sm:$0xf]
    %v64 = vld [vmem:[%s0 + $0x8] sm:$0x1]
    %v65 = vld [vmem:[%s0 + $0xc] sm:$0xf]
    %v66 = vld [vmem:[%s0 + $0x10] sm:$0xf]
    %v67 = vld [vmem:[%s0 + $0x14] sm:$0x1]
    %v68 = vld [vmem:[#allocation3] sm:$0xf]
    %v69 = vld [vmem:[#allocation3 + $0x4] sm:$0xf]
    %v70 = vld [vmem:[#allocation3 + $0x8] sm:$0xf]
    %v71 = vld [vmem:[#allocation3 + $0xc] sm:$0xf]
    %v72 = vld [vmem:[#allocation3 + $0x10] sm:$0xf]
    %v73 = vld [vmem:[#allocation3 + $0x14] sm:$0xf]
    %v74 = vld [vmem:[#allocation3 + $0x18] sm:$0xf]
    %v75 = vld [vmem:[#allocation3 + $0x1c] sm:$0xf]
    %v76 = vld [vmem:[#allocation3 + $0x20] sm:$0xf]
    %v77 = vld [vmem:[#allocation3 + $0x24] sm:$0xf]
    %v78 = vld [vmem:[#allocation3 + $0x28] sm:$0xf]
    %v79 = vld [vmem:[#allocation3 + $0x2c] sm:$0xf]
    %v80 = vld [vmem:[#allocation3 + $0x30] sm:$0xf]
    %v81 = vld [vmem:[#allocation3 + $0x34] sm:$0xf]
    %v82 = vld [vmem:[#allocation3 + $0x38] sm:$0xf]
    %v83 = vld [vmem:[#allocation3 + $0x3c] sm:$0xf]
    %vm84 = vsmask.f32 3328
    %vm85 = vsmask.f32 7440
    %vm86 = vmor %vm84, %vm85
    %v88 = vshrl.u32 %v62, 16
    %v90 = vrot.slane %v88, 4
    %v91 = vshll.u32 %v62, 16
    %v93 = vrot.slane %v91, 5
    %v94 = vor.u32 %v90, %v93
    %v95 = vrot.slane %v94, 4
    %v97 = vshll.u32 %v63, 16
    %v99 = vrot.slane %v97, 5
    %v100 = vsel %vm86, %v95, %v99
    %v101 = vshrl.u32 %v63, 16
    %v103 = vrot.slane %v101, 4
    %v104 = vor.u32 %v103, %v99
    %v105 = vrot.slane %v104, 4
    %v107 = vshll.u32 %v64, 16
    %v109 = vrot.slane %v107, 5
    %v110 = vsel %vm86, %v105, %v109
    %v112 = vshrl.u32 %v65, 16
    %v114 = vrot.slane %v112, 4
    %v115 = vshll.u32 %v65, 16
    %v117 = vrot.slane %v115, 5
    %v118 = vor.u32 %v114, %v117
    %v119 = vrot.slane %v118, 4
    %v121 = vshll.u32 %v66, 16
    %v123 = vrot.slane %v121, 5
    %v124 = vsel %vm86, %v119, %v123
    %v125 = vshrl.u32 %v66, 16
    %v127 = vrot.slane %v125, 4
    %v128 = vor.u32 %v127, %v123
    %v129 = vrot.slane %v128, 4
    %v131 = vshll.u32 %v67, 16
    %v133 = vrot.slane %v131, 5
    %v134 = vsel %vm86, %v129, %v133
    %s135 = scalar_lea.vmem [#allocation3], 64
    %v136 = vld [vmem:[%s135] sm:$0xf]
    %v137 = vld [vmem:[%s135 + $0x4] sm:$0xf]
    %v138 = vld [vmem:[%s135 + $0x8] sm:$0xf]
    %v139 = vld [vmem:[%s135 + $0xc] sm:$0xf]
    %v140 = vld [vmem:[%s135 + $0x10] sm:$0xf]
    %v141 = vld [vmem:[%s135 + $0x14] sm:$0xf]
    %v142 = vld [vmem:[%s135 + $0x18] sm:$0xf]
    %v143 = vld [vmem:[%s135 + $0x1c] sm:$0xf]
    %v144 = vld [vmem:[%s135 + $0x20] sm:$0xf]
    %v145 = vld [vmem:[%s135 + $0x24] sm:$0xf]
    %v146 = vld [vmem:[%s135 + $0x28] sm:$0xf]
    %v147 = vld [vmem:[%s135 + $0x2c] sm:$0xf]
    %v148 = vld [vmem:[%s135 + $0x30] sm:$0xf]
    %v149 = vld [vmem:[%s135 + $0x34] sm:$0xf]
    %v150 = vld [vmem:[%s135 + $0x38] sm:$0xf]
    %v151 = vld [vmem:[%s135 + $0x3c] sm:$0xf]
    %v152 = vunpack.c.l.b16 %v100
    %v153 = vunpack.c.l.b16 %v110
    %v154 = vunpack.c.l.b16 %v124
    %v155 = vunpack.c.l.b16 %v134
    %v156 = vpack.c.b16 %v153, %v152
    %v157 = vpack.c.b16 %v155, %v154
    %v176 = vunpack.c.l.b16 %v136
    %v177 = vunpack.c.l.b16 %v137
    %v178 = vunpack.c.l.b16 %v138
    %v179 = vunpack.c.l.b16 %v139
    %v180 = vunpack.c.l.b16 %v140
    %v181 = vunpack.c.l.b16 %v141
    %v182 = vunpack.c.l.b16 %v142
    %v183 = vunpack.c.l.b16 %v143
    %v184 = vunpack.c.l.b16 %v144
    %v185 = vunpack.c.l.b16 %v145
    %v186 = vunpack.c.l.b16 %v146
    %v187 = vunpack.c.l.b16 %v147
    %v188 = vunpack.c.l.b16 %v148
    %v189 = vunpack.c.l.b16 %v149
    %v190 = vunpack.c.l.b16 %v150
    %v191 = vunpack.c.l.b16 %v151
    %v192 = vpack.c.b16 %v177, %v176
    %v193 = vpack.c.b16 %v179, %v178
    %v194 = vpack.c.b16 %v181, %v180
    %v195 = vpack.c.b16 %v183, %v182
    %v196 = vpack.c.b16 %v185, %v184
    %v197 = vpack.c.b16 %v187, %v186
    %v198 = vpack.c.b16 %v189, %v188
    %v199 = vpack.c.b16 %v191, %v190
    %208 = vmatpush.bf16.msra.mxu0 %v199
    %209 = vmatpush.bf16.msra.mxu0 %v198
    %210 = vmatpush.bf16.msra.mxu0 %v197
    %211 = vmatpush.bf16.msra.mxu0 %v196
    %212 = vmatpush.bf16.msra.mxu0 %v195
    %213 = vmatpush.bf16.msra.mxu0 %v194
    %214 = vmatpush.bf16.msra.mxu0 %v193
    %215 = vmatpush.bf16.msra.mxu0 %v192
    %216 = vmatmul.bf16.gmra.mxu0 %v156
    %v217 = vpop.f32.mrf.mxu0
    %v218 = vadd.f32 0.0, %v217
    %v219 = vpop.f32.mrf.mxu0
    %v220 = vadd.f32 0.0, %v219
    %221 = vmatmul.bf16.gmra.mxu0 %v157
    %v222 = vpop.f32.mrf.mxu0
    %v223 = vadd.f32 0.0, %v222
    %v224 = vpop.f32.mrf.mxu0
    %v225 = vadd.f32 0.0, %v224
    %226 = vdwg.mxu0
    %v231 = vunpack.c.l.b16 %v62
    %v232 = vunpack.c.l.b16 %v63
    %v233 = vunpack.c.l.b16 %v65
    %v234 = vunpack.c.l.b16 %v66
    %v235 = vpack.c.b16 %v232, %v231
    %v236 = vpack.c.b16 %v234, %v233
    %v255 = vunpack.c.l.b16 %v68
    %v256 = vunpack.c.l.b16 %v69
    %v257 = vunpack.c.l.b16 %v70
    %v258 = vunpack.c.l.b16 %v71
    %v259 = vunpack.c.l.b16 %v72
    %v260 = vunpack.c.l.b16 %v73
    %v261 = vunpack.c.l.b16 %v74
    %v262 = vunpack.c.l.b16 %v75
    %v263 = vunpack.c.l.b16 %v76
    %v264 = vunpack.c.l.b16 %v77
    %v265 = vunpack.c.l.b16 %v78
    %v266 = vunpack.c.l.b16 %v79
    %v267 = vunpack.c.l.b16 %v80
    %v268 = vunpack.c.l.b16 %v81
    %v269 = vunpack.c.l.b16 %v82
    %v270 = vunpack.c.l.b16 %v83
    %v271 = vpack.c.b16 %v256, %v255
    %v272 = vpack.c.b16 %v258, %v257
    %v273 = vpack.c.b16 %v260, %v259
    %v274 = vpack.c.b16 %v262, %v261
    %v275 = vpack.c.b16 %v264, %v263
    %v276 = vpack.c.b16 %v266, %v265
    %v277 = vpack.c.b16 %v268, %v267
    %v278 = vpack.c.b16 %v270, %v269
    %287 = vmatpush.bf16.msra.mxu0 %v278
    %288 = vmatpush.bf16.msra.mxu0 %v277
    %289 = vmatpush.bf16.msra.mxu0 %v276
    %290 = vmatpush.bf16.msra.mxu0 %v275
    %291 = vmatpush.bf16.msra.mxu0 %v274
    %292 = vmatpush.bf16.msra.mxu0 %v273
    %293 = vmatpush.bf16.msra.mxu0 %v272
    %294 = vmatpush.bf16.msra.mxu0 %v271
    %295 = vmatmul.bf16.gmra.mxu0 %v235
    %v296 = vpop.f32.mrf.mxu0
    %v297 = vadd.f32 %v218, %v296
    %v298 = vpop.f32.mrf.mxu0
    %v299 = vadd.f32 %v220, %v298
    %300 = vmatmul.bf16.gmra.mxu0 %v236
    %v301 = vpop.f32.mrf.mxu0
    %v302 = vadd.f32 %v223, %v301
    %v303 = vpop.f32.mrf.mxu0
    %v304 = vadd.f32 %v225, %v303
    %305 = vdwg.mxu0
    %vm308 = vcmask 1042432
    %vm309 = vcmask 1046532
    %vm310 = vmor %vm308, %vm309
    %v311 = vrot.slane %v62, 5
    %v312 = vrot.slane %v311, 4
    %v313 = vrot.slane %v63, 5
    %v314 = vsel %vm310, %v312, %v313
    %v315 = vrot.slane %v313, 4
    %v316 = vrot.slane %v64, 5
    %v317 = vsel %vm310, %v315, %v316
    %v318 = vrot.slane %v65, 5
    %v319 = vrot.slane %v318, 4
    %v320 = vrot.slane %v66, 5
    %v321 = vsel %vm310, %v319, %v320
    %v322 = vrot.slane %v320, 4
    %v323 = vrot.slane %v67, 5
    %v324 = vsel %vm310, %v322, %v323
    %s325 = scalar_lea.vmem [#allocation3], 128
    %v326 = vld [vmem:[%s325] sm:$0xf]
    %v327 = vld [vmem:[%s325 + $0x4] sm:$0xf]
    %v328 = vld [vmem:[%s325 + $0x8] sm:$0xf]
    %v329 = vld [vmem:[%s325 + $0xc] sm:$0xf]
    %v330 = vld [vmem:[%s325 + $0x10] sm:$0xf]
    %v331 = vld [vmem:[%s325 + $0x14] sm:$0xf]
    %v332 = vld [vmem:[%s325 + $0x18] sm:$0xf]
    %v333 = vld [vmem:[%s325 + $0x1c] sm:$0xf]
    %v334 = vld [vmem:[%s325 + $0x20] sm:$0xf]
    %v335 = vld [vmem:[%s325 + $0x24] sm:$0xf]
    %v336 = vld [vmem:[%s325 + $0x28] sm:$0xf]
    %v337 = vld [vmem:[%s325 + $0x2c] sm:$0xf]
    %v338 = vld [vmem:[%s325 + $0x30] sm:$0xf]
    %v339 = vld [vmem:[%s325 + $0x34] sm:$0xf]
    %v340 = vld [vmem:[%s325 + $0x38] sm:$0xf]
    %v341 = vld [vmem:[%s325 + $0x3c] sm:$0xf]
    %v342 = vunpack.c.l.b16 %v314
    %v343 = vunpack.c.l.b16 %v317
    %v344 = vunpack.c.l.b16 %v321
    %v345 = vunpack.c.l.b16 %v324
    %v346 = vpack.c.b16 %v343, %v342
    %v347 = vpack.c.b16 %v345, %v344
    %v366 = vunpack.c.l.b16 %v326
    %v367 = vunpack.c.l.b16 %v327
    %v368 = vunpack.c.l.b16 %v328
    %v369 = vunpack.c.l.b16 %v329
    %v370 = vunpack.c.l.b16 %v330
    %v371 = vunpack.c.l.b16 %v331
    %v372 = vunpack.c.l.b16 %v332
    %v373 = vunpack.c.l.b16 %v333
    %v374 = vunpack.c.l.b16 %v334
    %v375 = vunpack.c.l.b16 %v335
    %v376 = vunpack.c.l.b16 %v336
    %v377 = vunpack.c.l.b16 %v337
    %v378 = vunpack.c.l.b16 %v338
    %v379 = vunpack.c.l.b16 %v339
    %v380 = vunpack.c.l.b16 %v340
    %v381 = vunpack.c.l.b16 %v341
    %v382 = vpack.c.b16 %v367, %v366
    %v383 = vpack.c.b16 %v369, %v368
    %v384 = vpack.c.b16 %v371, %v370
    %v385 = vpack.c.b16 %v373, %v372
    %v386 = vpack.c.b16 %v375, %v374
    %v387 = vpack.c.b16 %v377, %v376
    %v388 = vpack.c.b16 %v379, %v378
    %v389 = vpack.c.b16 %v381, %v380
    %398 = vmatpush.bf16.msra.mxu0 %v389
    %399 = vmatpush.bf16.msra.mxu0 %v388
    %400 = vmatpush.bf16.msra.mxu0 %v387
    %401 = vmatpush.bf16.msra.mxu0 %v386
    %402 = vmatpush.bf16.msra.mxu0 %v385
    %403 = vmatpush.bf16.msra.mxu0 %v384
    %404 = vmatpush.bf16.msra.mxu0 %v383
    %405 = vmatpush.bf16.msra.mxu0 %v382
    %406 = vmatmul.bf16.gmra.mxu0 %v346
    %v407 = vpop.f32.mrf.mxu0
    %v408 = vadd.f32 0.0, %v407
    %v409 = vpop.f32.mrf.mxu0
    %v410 = vadd.f32 0.0, %v409
    %411 = vmatmul.bf16.gmra.mxu0 %v347
    %v412 = vpop.f32.mrf.mxu0
    %v413 = vadd.f32 0.0, %v412
    %v414 = vpop.f32.mrf.mxu0
    %v415 = vadd.f32 0.0, %v414
    %416 = vdwg.mxu0
    %v417 = vadd.f32 %v297, %v408
    %v418 = vadd.f32 %v299, %v410
    %v419 = vadd.f32 %v302, %v413
    %v420 = vadd.f32 %v304, %v415
    %v421 = vld [vmem:[%s3] sm:$0x1]
    %v423 = vperm.slane %v421, 0
    %v425 = vmul.f32 %v417, %v423
    %v426 = vmul.f32 %v418, %v423
    %v427 = vmul.f32 %v419, %v423
    %v428 = vmul.f32 %v420, %v423
    %v429 = vld [vmem:[%s4] sm:$0x1]
    %v431 = vperm.slane %v429, 0
    %v433 = vadd.f32 %v425, %v431
    %v434 = vadd.f32 %v426, %v431
    %v435 = vadd.f32 %v427, %v431
    %v436 = vadd.f32 %v428, %v431
    %v437 = vmax.f32 %v433, 0.0
    %v438 = vmax.f32 %v434, 0.0
    %v439 = vmax.f32 %v435, 0.0
    %v440 = vmax.f32 %v436, 0.0
    %441 = vst [vmem:[#allocation2] sm:$0x1] 0.0
    %442 = vst [vmem:[#allocation2 + $0x18] sm:$0x1] 0.0
    %443 = vst [vmem:[#allocation2 + $0x11] sm:$0x1] 0.0
    %444 = vst [vmem:[#allocation2 + $0x29] sm:$0x1] 0.0
    %445 = vst [vmem:[#allocation2 + $0x1] sm:$0xff] %v437
    %446 = vst [vmem:[#allocation2 + $0x9] sm:$0xff] %v438
    %447 = vst [vmem:[#allocation2 + $0x19] sm:$0xff] %v439
    %448 = vst [vmem:[#allocation2 + $0x21] sm:$0xff] %v440
    %v449 = vld [vmem:[#allocation2] sm:$0xff]
    %v450 = vld [vmem:[#allocation2 + $0x8] sm:$0xff]
    %v451 = vld [vmem:[#allocation2 + $0x10] sm:$0x3]
    %v452 = vld [vmem:[#allocation2 + $0x18] sm:$0xff]
    %v453 = vld [vmem:[#allocation2 + $0x20] sm:$0xff]
    %v454 = vld [vmem:[#allocation2 + $0x28] sm:$0x3]
    %v455 = vpack.c.bf16 %v449, %v449
    %v456 = vpack.c.bf16 %v450, %v450
    %v457 = vpack.c.bf16 %v451, %v451
    %v458 = vpack.c.bf16 %v452, %v452
    %v459 = vpack.c.bf16 %v453, %v453
    %v460 = vpack.c.bf16 %v454, %v454
    %v461 = vld [vmem:[#allocation6] sm:$0xf]
    %v462 = vld [vmem:[#allocation6 + $0x4] sm:$0xf]
    %v463 = vld [vmem:[#allocation6 + $0x8] sm:$0xf]
    %v464 = vld [vmem:[#allocation6 + $0xc] sm:$0xf]
    %v465 = vld [vmem:[#allocation6 + $0x10] sm:$0xf]
    %v466 = vld [vmem:[#allocation6 + $0x14] sm:$0xf]
    %v467 = vld [vmem:[#allocation6 + $0x18] sm:$0xf]
    %v468 = vld [vmem:[#allocation6 + $0x1c] sm:$0xf]
    %v469 = vld [vmem:[#allocation6 + $0x20] sm:$0xf]
    %v470 = vld [vmem:[#allocation6 + $0x24] sm:$0xf]
    %v471 = vld [vmem:[#allocation6 + $0x28] sm:$0xf]
    %v472 = vld [vmem:[#allocation6 + $0x2c] sm:$0xf]
    %v473 = vld [vmem:[#allocation6 + $0x30] sm:$0xf]
    %v474 = vld [vmem:[#allocation6 + $0x34] sm:$0xf]
    %v475 = vld [vmem:[#allocation6 + $0x38] sm:$0xf]
    %v476 = vld [vmem:[#allocation6 + $0x3c] sm:$0xf]
    %v478 = vshrl.u32 %v455, 16
    %v480 = vrot.slane %v478, 4
    %v481 = vshll.u32 %v455, 16
    %v483 = vrot.slane %v481, 5
    %v484 = vor.u32 %v480, %v483
    %v485 = vrot.slane %v484, 4
    %v487 = vshll.u32 %v456, 16
    %v489 = vrot.slane %v487, 5
    %v490 = vsel %vm86, %v485, %v489
    %v491 = vshrl.u32 %v456, 16
    %v493 = vrot.slane %v491, 4
    %v494 = vor.u32 %v493, %v489
    %v495 = vrot.slane %v494, 4
    %v497 = vshll.u32 %v457, 16
    %v499 = vrot.slane %v497, 5
    %v500 = vsel %vm86, %v495, %v499
    %v502 = vshrl.u32 %v458, 16
    %v504 = vrot.slane %v502, 4
    %v505 = vshll.u32 %v458, 16
    %v507 = vrot.slane %v505, 5
    %v508 = vor.u32 %v504, %v507
    %v509 = vrot.slane %v508, 4
    %v511 = vshll.u32 %v459, 16
    %v513 = vrot.slane %v511, 5
    %v514 = vsel %vm86, %v509, %v513
    %v515 = vshrl.u32 %v459, 16
    %v517 = vrot.slane %v515, 4
    %v518 = vor.u32 %v517, %v513
    %v519 = vrot.slane %v518, 4
    %v521 = vshll.u32 %v460, 16
    %v523 = vrot.slane %v521, 5
    %v524 = vsel %vm86, %v519, %v523
    %s525 = scalar_lea.vmem [#allocation6], 64
    %v526 = vld [vmem:[%s525] sm:$0xf]
    %v527 = vld [vmem:[%s525 + $0x4] sm:$0xf]
    %v528 = vld [vmem:[%s525 + $0x8] sm:$0xf]
    %v529 = vld [vmem:[%s525 + $0xc] sm:$0xf]
    %v530 = vld [vmem:[%s525 + $0x10] sm:$0xf]
    %v531 = vld [vmem:[%s525 + $0x14] sm:$0xf]
    %v532 = vld [vmem:[%s525 + $0x18] sm:$0xf]
    %v533 = vld [vmem:[%s525 + $0x1c] sm:$0xf]
    %v534 = vld [vmem:[%s525 + $0x20] sm:$0xf]
    %v535 = vld [vmem:[%s525 + $0x24] sm:$0xf]
    %v536 = vld [vmem:[%s525 + $0x28] sm:$0xf]
    %v537 = vld [vmem:[%s525 + $0x2c] sm:$0xf]
    %v538 = vld [vmem:[%s525 + $0x30] sm:$0xf]
    %v539 = vld [vmem:[%s525 + $0x34] sm:$0xf]
    %v540 = vld [vmem:[%s525 + $0x38] sm:$0xf]
    %v541 = vld [vmem:[%s525 + $0x3c] sm:$0xf]
    %v542 = vunpack.c.l.b16 %v490
    %v543 = vunpack.c.l.b16 %v500
    %v544 = vunpack.c.l.b16 %v514
    %v545 = vunpack.c.l.b16 %v524
    %v546 = vpack.c.b16 %v543, %v542
    %v547 = vpack.c.b16 %v545, %v544
    %v566 = vunpack.c.l.b16 %v526
    %v567 = vunpack.c.l.b16 %v527
    %v568 = vunpack.c.l.b16 %v528
    %v569 = vunpack.c.l.b16 %v529
    %v570 = vunpack.c.l.b16 %v530
    %v571 = vunpack.c.l.b16 %v531
    %v572 = vunpack.c.l.b16 %v532
    %v573 = vunpack.c.l.b16 %v533
    %v574 = vunpack.c.l.b16 %v534
    %v575 = vunpack.c.l.b16 %v535
    %v576 = vunpack.c.l.b16 %v536
    %v577 = vunpack.c.l.b16 %v537
    %v578 = vunpack.c.l.b16 %v538
    %v579 = vunpack.c.l.b16 %v539
    %v580 = vunpack.c.l.b16 %v540
    %v581 = vunpack.c.l.b16 %v541
    %v582 = vpack.c.b16 %v567, %v566
    %v583 = vpack.c.b16 %v569, %v568
    %v584 = vpack.c.b16 %v571, %v570
    %v585 = vpack.c.b16 %v573, %v572
    %v586 = vpack.c.b16 %v575, %v574
    %v587 = vpack.c.b16 %v577, %v576
    %v588 = vpack.c.b16 %v579, %v578
    %v589 = vpack.c.b16 %v581, %v580
    %598 = vmatpush.bf16.msra.mxu0 %v589
    %599 = vmatpush.bf16.msra.mxu0 %v588
    %600 = vmatpush.bf16.msra.mxu0 %v587
    %601 = vmatpush.bf16.msra.mxu0 %v586
    %602 = vmatpush.bf16.msra.mxu0 %v585
    %603 = vmatpush.bf16.msra.mxu0 %v584
    %604 = vmatpush.bf16.msra.mxu0 %v583
    %605 = vmatpush.bf16.msra.mxu0 %v582
    %606 = vmatmul.bf16.gmra.mxu0 %v546
    %v607 = vpop.f32.mrf.mxu0
    %v608 = vadd.f32 0.0, %v607
    %v609 = vpop.f32.mrf.mxu0
    %v610 = vadd.f32 0.0, %v609
    %611 = vmatmul.bf16.gmra.mxu0 %v547
    %v612 = vpop.f32.mrf.mxu0
    %v613 = vadd.f32 0.0, %v612
    %v614 = vpop.f32.mrf.mxu0
    %v615 = vadd.f32 0.0, %v614
    %616 = vdwg.mxu0
    %v621 = vunpack.c.l.b16 %v455
    %v622 = vunpack.c.l.b16 %v456
    %v623 = vunpack.c.l.b16 %v458
    %v624 = vunpack.c.l.b16 %v459
    %v625 = vpack.c.b16 %v622, %v621
    %v626 = vpack.c.b16 %v624, %v623
    %v645 = vunpack.c.l.b16 %v461
    %v646 = vunpack.c.l.b16 %v462
    %v647 = vunpack.c.l.b16 %v463
    %v648 = vunpack.c.l.b16 %v464
    %v649 = vunpack.c.l.b16 %v465
    %v650 = vunpack.c.l.b16 %v466
    %v651 = vunpack.c.l.b16 %v467
    %v652 = vunpack.c.l.b16 %v468
    %v653 = vunpack.c.l.b16 %v469
    %v654 = vunpack.c.l.b16 %v470
    %v655 = vunpack.c.l.b16 %v471
    %v656 = vunpack.c.l.b16 %v472
    %v657 = vunpack.c.l.b16 %v473
    %v658 = vunpack.c.l.b16 %v474
    %v659 = vunpack.c.l.b16 %v475
    %v660 = vunpack.c.l.b16 %v476
    %v661 = vpack.c.b16 %v646, %v645
    %v662 = vpack.c.b16 %v648, %v647
    %v663 = vpack.c.b16 %v650, %v649
    %v664 = vpack.c.b16 %v652, %v651
    %v665 = vpack.c.b16 %v654, %v653
    %v666 = vpack.c.b16 %v656, %v655
    %v667 = vpack.c.b16 %v658, %v657
    %v668 = vpack.c.b16 %v660, %v659
    %677 = vmatpush.bf16.msra.mxu0 %v668
    %678 = vmatpush.bf16.msra.mxu0 %v667
    %679 = vmatpush.bf16.msra.mxu0 %v666
    %680 = vmatpush.bf16.msra.mxu0 %v665
    %681 = vmatpush.bf16.msra.mxu0 %v664
    %682 = vmatpush.bf16.msra.mxu0 %v663
    %683 = vmatpush.bf16.msra.mxu0 %v662
    %684 = vmatpush.bf16.msra.mxu0 %v661
    %685 = vmatmul.bf16.gmra.mxu0 %v625
    %v686 = vpop.f32.mrf.mxu0
    %v687 = vadd.f32 %v608, %v686
    %v688 = vpop.f32.mrf.mxu0
    %v689 = vadd.f32 %v610, %v688
    %690 = vmatmul.bf16.gmra.mxu0 %v626
    %v691 = vpop.f32.mrf.mxu0
    %v692 = vadd.f32 %v613, %v691
    %v693 = vpop.f32.mrf.mxu0
    %v694 = vadd.f32 %v615, %v693
    %695 = vdwg.mxu0
    %v698 = vrot.slane %v455, 5
    %v699 = vrot.slane %v698, 4
    %v700 = vrot.slane %v456, 5
    %v701 = vsel %vm310, %v699, %v700
    %v702 = vrot.slane %v700, 4
    %v703 = vrot.slane %v457, 5
    %v704 = vsel %vm310, %v702, %v703
    %v705 = vrot.slane %v458, 5
    %v706 = vrot.slane %v705, 4
    %v707 = vrot.slane %v459, 5
    %v708 = vsel %vm310, %v706, %v707
    %v709 = vrot.slane %v707, 4
    %v710 = vrot.slane %v460, 5
    %v711 = vsel %vm310, %v709, %v710
    %s712 = scalar_lea.vmem [#allocation6], 128
    %v713 = vld [vmem:[%s712] sm:$0xf]
    %v714 = vld [vmem:[%s712 + $0x4] sm:$0xf]
    %v715 = vld [vmem:[%s712 + $0x8] sm:$0xf]
    %v716 = vld [vmem:[%s712 + $0xc] sm:$0xf]
    %v717 = vld [vmem:[%s712 + $0x10] sm:$0xf]
    %v718 = vld [vmem:[%s712 + $0x14] sm:$0xf]
    %v719 = vld [vmem:[%s712 + $0x18] sm:$0xf]
    %v720 = vld [vmem:[%s712 + $0x1c] sm:$0xf]
    %v721 = vld [vmem:[%s712 + $0x20] sm:$0xf]
    %v722 = vld [vmem:[%s712 + $0x24] sm:$0xf]
    %v723 = vld [vmem:[%s712 + $0x28] sm:$0xf]
    %v724 = vld [vmem:[%s712 + $0x2c] sm:$0xf]
    %v725 = vld [vmem:[%s712 + $0x30] sm:$0xf]
    %v726 = vld [vmem:[%s712 + $0x34] sm:$0xf]
    %v727 = vld [vmem:[%s712 + $0x38] sm:$0xf]
    %v728 = vld [vmem:[%s712 + $0x3c] sm:$0xf]
    %v729 = vunpack.c.l.b16 %v701
    %v730 = vunpack.c.l.b16 %v704
    %v731 = vunpack.c.l.b16 %v708
    %v732 = vunpack.c.l.b16 %v711
    %v733 = vpack.c.b16 %v730, %v729
    %v734 = vpack.c.b16 %v732, %v731
    %v753 = vunpack.c.l.b16 %v713
    %v754 = vunpack.c.l.b16 %v714
    %v755 = vunpack.c.l.b16 %v715
    %v756 = vunpack.c.l.b16 %v716
    %v757 = vunpack.c.l.b16 %v717
    %v758 = vunpack.c.l.b16 %v718
    %v759 = vunpack.c.l.b16 %v719
    %v760 = vunpack.c.l.b16 %v720
    %v761 = vunpack.c.l.b16 %v721
    %v762 = vunpack.c.l.b16 %v722
    %v763 = vunpack.c.l.b16 %v723
    %v764 = vunpack.c.l.b16 %v724
    %v765 = vunpack.c.l.b16 %v725
    %v766 = vunpack.c.l.b16 %v726
    %v767 = vunpack.c.l.b16 %v727
    %v768 = vunpack.c.l.b16 %v728
    %v769 = vpack.c.b16 %v754, %v753
    %v770 = vpack.c.b16 %v756, %v755
    %v771 = vpack.c.b16 %v758, %v757
    %v772 = vpack.c.b16 %v760, %v759
    %v773 = vpack.c.b16 %v762, %v761
    %v774 = vpack.c.b16 %v764, %v763
    %v775 = vpack.c.b16 %v766, %v765
    %v776 = vpack.c.b16 %v768, %v767
    %785 = vmatpush.bf16.msra.mxu0 %v776
    %786 = vmatpush.bf16.msra.mxu0 %v775
    %787 = vmatpush.bf16.msra.mxu0 %v774
    %788 = vmatpush.bf16.msra.mxu0 %v773
    %789 = vmatpush.bf16.msra.mxu0 %v772
    %790 = vmatpush.bf16.msra.mxu0 %v771
    %791 = vmatpush.bf16.msra.mxu0 %v770
    %792 = vmatpush.bf16.msra.mxu0 %v769
    %793 = vmatmul.bf16.gmra.mxu0 %v733
    %v794 = vpop.f32.mrf.mxu0
    %v795 = vadd.f32 0.0, %v794
    %v796 = vpop.f32.mrf.mxu0
    %v797 = vadd.f32 0.0, %v796
    %798 = vmatmul.bf16.gmra.mxu0 %v734
    %v799 = vpop.f32.mrf.mxu0
    %v800 = vadd.f32 0.0, %v799
    %v801 = vpop.f32.mrf.mxu0
    %v802 = vadd.f32 0.0, %v801
    %803 = vdwg.mxu0
    %v804 = vadd.f32 %v687, %v795
    %v805 = vadd.f32 %v689, %v797
    %v806 = vadd.f32 %v692, %v800
    %v807 = vadd.f32 %v694, %v802
    %v808 = vld [vmem:[%s1] sm:$0xff]
    %v809 = vld [vmem:[%s1 + $0x8] sm:$0xff]
    %v810 = vld [vmem:[%s1 + $0x10] sm:$0xff]
    %v811 = vld [vmem:[%s1 + $0x18] sm:$0xff]
    %v812 = vld [vmem:[%s6] sm:$0x1]
    %v814 = vperm.slane %v812, 0
    %v816 = vmul.f32 %v804, %v814
    %v817 = vmul.f32 %v805, %v814
    %v818 = vmul.f32 %v806, %v814
    %v819 = vmul.f32 %v807, %v814
    %v820 = vld [vmem:[%s7] sm:$0x1]
    %v822 = vperm.slane %v820, 0
    %v824 = vadd.f32 %v816, %v822
    %v825 = vadd.f32 %v817, %v822
    %v826 = vadd.f32 %v818, %v822
    %v827 = vadd.f32 %v819, %v822
    %v828 = vadd.f32 %v824, %v808
    %v829 = vadd.f32 %v825, %v809
    %v830 = vadd.f32 %v826, %v810
    %v831 = vadd.f32 %v827, %v811
    %v832 = vmax.f32 %v828, 0.0
    %v833 = vmax.f32 %v829, 0.0
    %v834 = vmax.f32 %v830, 0.0
    %v835 = vmax.f32 %v831, 0.0
    %836 = vst [vmem:[#allocation8] sm:$0xff] %v832
    %837 = vst [vmem:[#allocation8 + $0x8] sm:$0xff] %v833
    %838 = vst [vmem:[#allocation8 + $0x10] sm:$0xff] %v834
    %839 = vst [vmem:[#allocation8 + $0x18] sm:$0xff] %v835
    // Predicated region
    $region42: #{tpu_custom_call.1} parent=1 // pred_check
      _
    $region43: #{tpu_custom_call.1} parent=1 // pred_check_branch
      %841 = sbr.rel (0) target = $region45
    $region44: #{tpu_custom_call.1} parent=1 // pred_region
      %843 = vsyncadd [#allocation5], 0
      %s844 = sshll.u32 [#allocation8], 4
      %s845 = int_to_ptr.vmem [resolvable:$true] %s844
      %s846 = sshll.u32 %s8, 4
      %s847 = int_to_ptr.hbm [resolvable:$true] %s846
      %852 = dma.vmem_to_hbm [thread:$0]  %s845, 512, %s847, [#allocation5], 128, 128, 8
    $region45: #{tpu_custom_call.1} parent=1 // pred_fallthru
      _
    // Predicated region
    $region46: #{tpu_custom_call.1} parent=1 // pred_check
      _
    $region47: #{tpu_custom_call.1} parent=1 // pred_check_branch
      %854 = sbr.rel (0) target = $region49
    $region48: #{tpu_custom_call.1} parent=1 // pred_region
      %856 = dma.done [#allocation5], 512
    $region49: #{tpu_custom_call.1} parent=1 // pred_fallthru
      _
    %857 = vsyncpa [#allocation4], 1
    %858 = vsyncpa [#allocation7], 1
    %859 = vsyncpa [#allocation5], 1

</llo_original>
